<compile_context>
chip_gen: v7x
topology: tpu7x:2x2x1
jax: 0.10.0
libtpu: 0.0.40
codegen_flags: <defaults>
</compile_context>

<pallas_src>
import jax
import jax.numpy as jnp
from jax.experimental import pallas as pl
from jax.experimental.pallas import tpu as pltpu

_PAD = 128  # lane width: hidden (50) and num_classes (10) are zero-padded to it


def _round_up(x, m):
    return ((x + m - 1) // m) * m


def _choose_tb(B, max_tb=2048):
    """Batch tile: one full-extent block for small B (per-step overhead
    dominates), otherwise big sublane-aligned tiles with >=2 grid steps so both
    TensorCores are used on v7x (harmless on single-TC v5e/v6e)."""
    if B <= 512:
        return B
    return min(_round_up(pl.cdiv(B, 2), 8), max_tb)


def _dino_head_kernel(xl_ref, xb_ref, cs_ref, w1l_ref, w1b_ref, w2_ref, b_ref,
                      out_ref):
    """xl_ref:  [TB, Q*L]  bf16 raw pred_logits, flat order d = q*L + c
       xb_ref:  [TB, Q*4]  bf16 sigmoid'd pred_boxes, flat order d = q*4 + cb
       cs_ref:  [Q*L, Q*L] f32 0/1 coset matrix (i ~ j iff i % L == j % L)
       w1l_ref: [Q*L, 128] bf16 BN1-folded W1 rows for the logit features
       w1b_ref: [Q*4, 128] bf16 BN1-folded W1 rows for the box features
       w2_ref:  [128, 128] bf16 BN2-folded W2 (hidden/class axes zero-padded)
       b_ref:   [2, 128]   f32 folded biases (row 0 = b1, row 1 = b2)
       out_ref: [TB, 128]  bf16 padded class logits (first NC lanes valid)
    """
    # --- F.softmax(pred_logits, dim=1): softmax over the QUERY axis ---------
    # Softmax is shift-invariant, so the row-global max is a valid (and safe)
    # shift for every per-feature query coset.  The per-coset sum over the Q
    # queries (lane stride L) is one small MXU matmul with the 0/1 membership
    # matrix, which also broadcasts the denominator back to every lane.
    x = xl_ref[...].astype(jnp.float32)                    # [TB, QL] f32 math
    m = jnp.max(x, axis=-1, keepdims=True)                 # [TB, 1]
    e = jnp.exp(x - m)                                     # EUP
    s = jnp.dot(e, cs_ref[...], preferred_element_type=jnp.float32)
    p = e * pl.reciprocal(s, approx=True)                  # softmaxed logits

    # --- Flatten + BN1 + Linear(D, 50) + ReLU (BN1 folded, matmul split) ----
    h = jnp.dot(p.astype(jnp.bfloat16), w1l_ref[...],
                preferred_element_type=jnp.float32)
    h = h + jnp.dot(xb_ref[...], w1b_ref[...],
                    preferred_element_type=jnp.float32)
    h = jnp.maximum(h + b_ref[0:1, :], 0.0)                # [TB, 128] f32

    # --- BN2 + Linear(50, num_classes) (BN2 folded) --------------------------
    out = jnp.dot(h.astype(jnp.bfloat16), w2_ref[...],
                  preferred_element_type=jnp.float32)
    out_ref[...] = (out + b_ref[1:2, :]).astype(out_ref.dtype)


def dino_bbox_head(pred_logits, pred_boxes, params, *, num_classes):
    B, Q, L = pred_logits.shape
    QL, QB = Q * L, Q * 4

    # No HBM concat/interleave: the detector head outputs go straight in
    # (collapsing contiguous dims is free); bf16 I/O halves the memory bill.
    # In deployment the detector would emit bf16 directly (cast is then a noop).
    xl = pred_logits.reshape(B, QL).astype(jnp.bfloat16)
    xb = pred_boxes.reshape(B, QB).astype(jnp.bfloat16)

    tb = _choose_tb(B)
    grid = (pl.cdiv(B, tb),)

    out_padded = pl.pallas_call(
        _dino_head_kernel,
        out_shape=jax.ShapeDtypeStruct((B, _PAD), jnp.bfloat16),
        grid=grid,
        in_specs=[
            pl.BlockSpec((tb, QL), lambda i: (i, 0)),       # batch-blocked
            pl.BlockSpec((tb, QB), lambda i: (i, 0)),       # batch-blocked
            pl.BlockSpec((QL, QL), lambda i: (0, 0)),       # resident coset M
            pl.BlockSpec((QL, _PAD), lambda i: (0, 0)),     # resident W1(logit)
            pl.BlockSpec((QB, _PAD), lambda i: (0, 0)),     # resident W1(box)
            pl.BlockSpec((_PAD, _PAD), lambda i: (0, 0)),   # resident W2
            pl.BlockSpec((2, _PAD), lambda i: (0, 0)),      # resident biases
        ],
        out_specs=pl.BlockSpec((tb, _PAD), lambda i: (i, 0)),
        compiler_params=pltpu.CompilerParams(
            dimension_semantics=("parallel",),      # 2nd TensorCore on v7x
            vmem_limit_bytes=32 * 1024 * 1024,      # safe on v5e..v7x tiles
        ),
    )(xl, xb, params["coset"], params["w1l"], params["w1b"], params["w2"],
      params["bias"])
    # Consumers that can take the padded [B, 128] bf16 logits should do so
    # directly; the slice below just matches the torch module's [B, NC] output.
    return out_padded[:, :num_classes]


def init_params(key, Q, L, H, NC):
    """Synthetic torch-like core_model params, then fold + permute + pad."""
    C = L + 4
    D = Q * C
    assert H <= _PAD and NC <= _PAD
    eps = 1e-5
    ks = jax.random.split(key, 12)

    # BatchNorm1d(D) (eval mode: running-stats affine)
    gamma1 = 1.0 + 0.1 * jax.random.normal(ks[0], (D,), jnp.float32)
    beta1 = 0.1 * jax.random.normal(ks[1], (D,), jnp.float32)
    rm1 = 0.1 * jax.random.normal(ks[2], (D,), jnp.float32)
    rv1 = 1.0 + 0.1 * jnp.abs(jax.random.normal(ks[3], (D,), jnp.float32))
    scale1 = gamma1 / jnp.sqrt(rv1 + eps)
    shift1 = beta1 - rm1 * scale1

    # Linear(D, 50): torch weight [H, D], bias [H]
    w1 = 0.05 * jax.random.normal(ks[4], (H, D), jnp.float32)
    b1 = 0.05 * jax.random.normal(ks[5], (H,), jnp.float32)

    # BatchNorm1d(50)
    gamma2 = 1.0 + 0.1 * jax.random.normal(ks[6], (H,), jnp.float32)
    beta2 = 0.1 * jax.random.normal(ks[7], (H,), jnp.float32)
    rm2 = 0.1 * jax.random.normal(ks[8], (H,), jnp.float32)
    rv2 = 1.0 + 0.1 * jnp.abs(jax.random.normal(ks[9], (H,), jnp.float32))
    scale2 = gamma2 / jnp.sqrt(rv2 + eps)
    shift2 = beta2 - rm2 * scale2

    # Linear(50, num_classes): torch weight [NC, H], bias [NC]
    w2 = 0.05 * jax.random.normal(ks[10], (NC, H), jnp.float32)
    b2 = 0.05 * jax.random.normal(ks[11], (NC,), jnp.float32)

    # ---- fold BN1 -> Linear1 and BN2 -> Linear2 (exact in eval mode) --------
    w1f = scale1[:, None] * w1.T               # [D, H], rows in torch order q*C+c
    b1f = b1 + shift1 @ w1.T                   # [H]
    w2f = scale2[:, None] * w2.T               # [H, NC]
    b2f = b2 + shift2 @ w2.T                   # [NC]

    # ---- permute W1 rows to the split, non-interleaved kernel input order ---
    w1f3 = w1f.reshape(Q, C, H)
    w1_logits = w1f3[:, :L, :].reshape(Q * L, H)   # rows ordered q*L + c
    w1_boxes = w1f3[:, L:, :].reshape(Q * 4, H)    # rows ordered q*4 + cb

    # ---- zero-pad hidden/class lanes to 128 and cast matmul operands to bf16
    w1l_p = jnp.zeros((Q * L, _PAD), jnp.float32).at[:, :H].set(w1_logits)
    w1b_p = jnp.zeros((Q * 4, _PAD), jnp.float32).at[:, :H].set(w1_boxes)
    w2_p = jnp.zeros((_PAD, _PAD), jnp.float32).at[:H, :NC].set(w2f)
    b1_p = jnp.zeros((_PAD,), jnp.float32).at[:H].set(b1f)
    b2_p = jnp.zeros((_PAD,), jnp.float32).at[:NC].set(b2f)

    # 0/1 coset-membership matrix: lanes i, j of the flat logits hold the same
    # within-query feature iff i % L == j % L; e @ coset is the per-query
    # softmax denominator, already broadcast back to every lane.
    lane_feat = jnp.arange(Q * L) % L
    coset = (lane_feat[:, None] == lane_feat[None, :]).astype(jnp.float32)

    kernel_params = dict(
        coset=coset,
        w1l=w1l_p.astype(jnp.bfloat16),            # [Q*L, 128]
        w1b=w1b_p.astype(jnp.bfloat16),            # [Q*4, 128]
        w2=w2_p.astype(jnp.bfloat16),              # [128, 128]
        bias=jnp.stack([b1_p, b2_p]),              # [2, 128] f32
    )
    ref_params = dict(scale1=scale1, shift1=shift1, w1=w1, b1=b1,
                      scale2=scale2, shift2=shift2, w2=w2, b2=b2)
    return kernel_params, ref_params


def reference(pred_logits, pred_boxes, rp):
    """Pure-JAX f32 reference of the torch forward (eval-mode BatchNorm)."""
    p = jax.nn.softmax(pred_logits, axis=1)
    feats = jnp.concatenate([p, pred_boxes], axis=2).reshape(
        pred_logits.shape[0], -1)
    y = feats * rp["scale1"] + rp["shift1"]
    h = jnp.maximum(y @ rp["w1"].T + rp["b1"], 0.0)
    h = h * rp["scale2"] + rp["shift2"]
    return h @ rp["w2"].T + rp["b2"]


if __name__ == "__main__":
    # batch=2, num_queries=8, seg_labels=12, hidden=50, num_classes=10
    B, Q, L, H, NC = 2, 8, 12, 50, 10

    key = jax.random.PRNGKey(0)
    k_logits, k_boxes, k_params = jax.random.split(key, 3)

    # TODO(synk): the DINO backbone + deformable-transformer object detector
    # has no clean Pallas equivalent; its outputs (pred_logits [B,Q,L] and
    # sigmoid'd pred_boxes [B,Q,4]) are synthesized and fed to the head kernel.
    pred_logits = jax.random.normal(k_logits, (B, Q, L), jnp.float32)
    pred_boxes = jax.nn.sigmoid(
        jax.random.normal(k_boxes, (B, Q, 4), jnp.float32))

    kernel_params, ref_params = init_params(k_params, Q, L, H, NC)

    out = dino_bbox_head(pred_logits, pred_boxes, kernel_params, num_classes=NC)
    out = jax.block_until_ready(out)

    ref = reference(pred_logits, pred_boxes, ref_params)
    assert out.shape == (B, NC)
    # Tolerance covers bf16 I/O + bf16 MXU operands (f32 accumulate) and the
    # approximate EUP reciprocal in the softmax normalization.
    out_f32 = out.astype(jnp.float32)
    max_err = jnp.max(jnp.abs(out_f32 - ref))
    assert jnp.allclose(out_f32, ref, rtol=3e-2, atol=3e-2), (max_err, out_f32, ref)
    print("KERNEL_OK")
</pallas_src>

<mosaic_0001>
module attributes {stable_mosaic.version = 11 : i64} {
  func.func @_dino_head_kernel(%arg0: i32, %arg1: memref<2x96xbf16, #tpu.memory_space<vmem>>, %arg2: memref<2x32xbf16, #tpu.memory_space<vmem>>, %arg3: memref<96x96xf32, #tpu.memory_space<vmem>>, %arg4: memref<96x128xbf16, #tpu.memory_space<vmem>>, %arg5: memref<32x128xbf16, #tpu.memory_space<vmem>>, %arg6: memref<128x128xbf16, #tpu.memory_space<vmem>>, %arg7: memref<2x128xf32, #tpu.memory_space<vmem>>, %arg8: memref<2x128xbf16, #tpu.memory_space<vmem>>) attributes {dimension_semantics = [#tpu.dimension_semantics<parallel>], iteration_bounds = array<i64: 1>, scalar_prefetch = 0 : i64, scratch_operands = 0 : i64, tpu.core_type = #tpu.core_type<tc>, window_params = [{transform_indices = @transform_0, window_bounds = array<i64: 2, 96>}, {transform_indices = @transform_1, window_bounds = array<i64: 2, 32>}, {pipeline_mode = #tpu.pipeline_mode<synchronous>, transform_indices = @transform_2, window_bounds = array<i64: 96, 96>}, {pipeline_mode = #tpu.pipeline_mode<synchronous>, transform_indices = @transform_3, window_bounds = array<i64: 96, 128>}, {pipeline_mode = #tpu.pipeline_mode<synchronous>, transform_indices = @transform_4, window_bounds = array<i64: 32, 128>}, {pipeline_mode = #tpu.pipeline_mode<synchronous>, transform_indices = @transform_5, window_bounds = array<i64: 128, 128>}, {pipeline_mode = #tpu.pipeline_mode<synchronous>, transform_indices = @transform_6, window_bounds = array<i64: 2, 128>}, {transform_indices = @transform_7, window_bounds = array<i64: 2, 128>}]} {
    %c0 = arith.constant 0 : index
    %c0_0 = arith.constant 0 : index
    %0 = vector.load %arg1[%c0, %c0_0] : memref<2x96xbf16, #tpu.memory_space<vmem>>, vector<2x96xbf16>
    %1 = arith.extf %0 : vector<2x96xbf16> to vector<2x96xf32>
    %cst = arith.constant dense<0xFF800000> : vector<2xf32>
    %2 = vector.multi_reduction <maximumf>, %1, %cst [1] : vector<2x96xf32> to vector<2xf32>
    %3 = vector.shape_cast %2 : vector<2xf32> to vector<2x1xf32>
    %4 = vector.broadcast %3 : vector<2x1xf32> to vector<2x96xf32>
    %5 = arith.subf %1, %4 : vector<2x96xf32>
    %6 = math.exp %5 : vector<2x96xf32>
    %c0_1 = arith.constant 0 : index
    %c0_2 = arith.constant 0 : index
    %7 = vector.load %arg3[%c0_1, %c0_2] : memref<96x96xf32, #tpu.memory_space<vmem>>, vector<96x96xf32>
    %cst_3 = arith.constant dense<0.000000e+00> : vector<2x96xf32>
    %8 = tpu.matmul %6, %7, %cst_3 {dimension_numbers = #tpu.dot_dimension_numbers<[1], [0], [0], [1], [0, 0, 1, 1], [], []>} : vector<2x96xf32>, vector<96x96xf32>, vector<2x96xf32> -> vector<2x96xf32>
    %9 = tpu.reciprocal %8 {approx = true} : vector<2x96xf32> -> vector<2x96xf32>
    %10 = arith.mulf %6, %9 : vector<2x96xf32>
    %11 = arith.truncf %10 : vector<2x96xf32> to vector<2x96xbf16>
    %c0_4 = arith.constant 0 : index
    %c0_5 = arith.constant 0 : index
    %12 = vector.load %arg4[%c0_4, %c0_5] : memref<96x128xbf16, #tpu.memory_space<vmem>>, vector<96x128xbf16>
    %cst_6 = arith.constant dense<0.000000e+00> : vector<2x128xf32>
    %13 = tpu.matmul %11, %12, %cst_6 {dimension_numbers = #tpu.dot_dimension_numbers<[1], [0], [0], [1], [0, 0, 1, 1], [], []>} : vector<2x96xbf16>, vector<96x128xbf16>, vector<2x128xf32> -> vector<2x128xf32>
    %c0_7 = arith.constant 0 : index
    %c0_8 = arith.constant 0 : index
    %14 = vector.load %arg2[%c0_7, %c0_8] : memref<2x32xbf16, #tpu.memory_space<vmem>>, vector<2x32xbf16>
    %c0_9 = arith.constant 0 : index
    %c0_10 = arith.constant 0 : index
    %15 = vector.load %arg5[%c0_9, %c0_10] : memref<32x128xbf16, #tpu.memory_space<vmem>>, vector<32x128xbf16>
    %cst_11 = arith.constant dense<0.000000e+00> : vector<2x128xf32>
    %16 = tpu.matmul %14, %15, %cst_11 {dimension_numbers = #tpu.dot_dimension_numbers<[1], [0], [0], [1], [0, 0, 1, 1], [], []>} : vector<2x32xbf16>, vector<32x128xbf16>, vector<2x128xf32> -> vector<2x128xf32>
    %17 = arith.addf %13, %16 : vector<2x128xf32>
    %c0_12 = arith.constant 0 : index
    %c0_13 = arith.constant 0 : index
    %18 = vector.load %arg7[%c0_12, %c0_13] : memref<2x128xf32, #tpu.memory_space<vmem>>, vector<1x128xf32>
    %19 = vector.broadcast %18 : vector<1x128xf32> to vector<2x128xf32>
    %20 = arith.addf %17, %19 : vector<2x128xf32>
    %cst_14 = arith.constant 0.000000e+00 : f32
    %21 = vector.broadcast %cst_14 : f32 to vector<2x128xf32>
    %22 = arith.maximumf %20, %21 : vector<2x128xf32>
    %23 = arith.truncf %22 : vector<2x128xf32> to vector<2x128xbf16>
    %c0_15 = arith.constant 0 : index
    %c0_16 = arith.constant 0 : index
    %24 = vector.load %arg6[%c0_15, %c0_16] : memref<128x128xbf16, #tpu.memory_space<vmem>>, vector<128x128xbf16>
    %cst_17 = arith.constant dense<0.000000e+00> : vector<2x128xf32>
    %25 = tpu.matmul %23, %24, %cst_17 {dimension_numbers = #tpu.dot_dimension_numbers<[1], [0], [0], [1], [0, 0, 1, 1], [], []>} : vector<2x128xbf16>, vector<128x128xbf16>, vector<2x128xf32> -> vector<2x128xf32>
    %c1 = arith.constant 1 : index
    %c0_18 = arith.constant 0 : index
    %26 = vector.load %arg7[%c1, %c0_18] : memref<2x128xf32, #tpu.memory_space<vmem>>, vector<1x128xf32>
    %27 = vector.broadcast %26 : vector<1x128xf32> to vector<2x128xf32>
    %28 = arith.addf %25, %27 : vector<2x128xf32>
    %29 = arith.truncf %28 : vector<2x128xf32> to vector<2x128xbf16>
    %c0_19 = arith.constant 0 : index
    %c0_20 = arith.constant 0 : index
    %30 = vector.load %arg8[%c0_19, %c0_20] : memref<2x128xbf16, #tpu.memory_space<vmem>>, vector<2x128xbf16>
    tpu.vector_store %arg8[%c0_19, %c0_20], %29 {strides = array<i32>} : memref<2x128xbf16, #tpu.memory_space<vmem>>, vector<2x128xbf16>,
    return
  }
  func.func @transform_0(%arg0: i32) -> (i32, i32) {
    %c0_i32 = arith.constant 0 : i32
    %c0_i32_0 = arith.constant 0 : i32
    return %arg0, %c0_i32 : i32, i32
  }
  func.func @transform_1(%arg0: i32) -> (i32, i32) {
    %c0_i32 = arith.constant 0 : i32
    %c0_i32_0 = arith.constant 0 : i32
    return %arg0, %c0_i32 : i32, i32
  }
  func.func @transform_2(%arg0: i32) -> (i32, i32) {
    %c0_i32 = arith.constant 0 : i32
    %c0_i32_0 = arith.constant 0 : i32
    %c0_i32_1 = arith.constant 0 : i32
    return %c0_i32, %c0_i32_0 : i32, i32
  }
  func.func @transform_3(%arg0: i32) -> (i32, i32) {
    %c0_i32 = arith.constant 0 : i32
    %c0_i32_0 = arith.constant 0 : i32
    %c0_i32_1 = arith.constant 0 : i32
    return %c0_i32, %c0_i32_0 : i32, i32
  }
  func.func @transform_4(%arg0: i32) -> (i32, i32) {
    %c0_i32 = arith.constant 0 : i32
    %c0_i32_0 = arith.constant 0 : i32
    %c0_i32_1 = arith.constant 0 : i32
    return %c0_i32, %c0_i32_0 : i32, i32
  }
  func.func @transform_5(%arg0: i32) -> (i32, i32) {
    %c0_i32 = arith.constant 0 : i32
    %c0_i32_0 = arith.constant 0 : i32
    %c0_i32_1 = arith.constant 0 : i32
    return %c0_i32, %c0_i32_0 : i32, i32
  }
  func.func @transform_6(%arg0: i32) -> (i32, i32) {
    %c0_i32 = arith.constant 0 : i32
    %c0_i32_0 = arith.constant 0 : i32
    %c0_i32_1 = arith.constant 0 : i32
    return %c0_i32, %c0_i32_0 : i32, i32
  }
  func.func @transform_7(%arg0: i32) -> (i32, i32) {
    %c0_i32 = arith.constant 0 : i32
    %c0_i32_0 = arith.constant 0 : i32
    return %arg0, %c0_i32 : i32, i32
  }
}

</mosaic_0001>

<llo_original>
// kernel: tpu_custom_call.1
$region0: #{tpu_custom_call.1}
  #allocation0 [shape = 'u32[]', space=smem, size = 0x4, offset = 0x4, fixed_abs, tag = 'smem constant byte address 0x4 - core index']
  #allocation1 [shape = 'u32[144,128]{1,0:T(1,128)}', space=vmem, size = 0x12000, scoped, tag = 'internal scratch']
  %s0 = inlined_call_operand.hbm [shape: bf16[2,96], index: 0, kind: input, shape index: {}]
  %s1 = inlined_call_operand.vmem [shape: bf16[2,32], index: 1, kind: input, shape index: {}]
  %s2 = inlined_call_operand.hbm [shape: f32[96,96], index: 2, kind: input, shape index: {}]
  %s3 = inlined_call_operand.hbm [shape: bf16[96,128], index: 3, kind: input, shape index: {}]
  %s4 = inlined_call_operand.hbm [shape: bf16[32,128], index: 4, kind: input, shape index: {}]
  %s5 = inlined_call_operand.hbm [shape: bf16[128,128], index: 5, kind: input, shape index: {}]
  %s6 = inlined_call_operand.vmem [shape: f32[2,128], index: 6, kind: input, shape index: {}]
  %s7 = inlined_call_operand.hbm [shape: bf16[2,128], index: 7, kind: output, shape index: {}]
  %s8 = sld [smem:[#allocation0]]
  $region58: #{tpu_custom_call.1} parent=0
    _
  %s10 = ssub.s32 1, %s8
  %s11 = scalar_select 0, %s10, %s8
  $region1: #{tpu_custom_call.1} parent=0
    #allocation2 [shape = 'u8[512]{0}', space=vmem, size = 0x400, scoped, tag = 'input window, operand 0, single buffered']
    #allocation3 [shape = 's32[1]{0}', space=sflag, size = 0x4, scoped, tag = 'scoped memory for tpu_custom_call.1']
    #allocation4 [shape = 's32[1]{0}', space=sflag, size = 0x4, scoped, tag = 'scoped memory for tpu_custom_call.1']
    #allocation5 [shape = 'u8[49152]{0}', space=vmem, size = 0xc000, scoped, tag = 'input window, operand 2, single buffered']
    #allocation6 [shape = 's32[1]{0}', space=sflag, size = 0x4, scoped, tag = 'scoped memory for tpu_custom_call.1']
    #allocation7 [shape = 'u8[24576]{0}', space=vmem, size = 0x6000, scoped, tag = 'input window, operand 3, single buffered']
    #allocation8 [shape = 'u8[8192]{0}', space=vmem, size = 0x2000, scoped, tag = 'input window, operand 4, single buffered']
    #allocation9 [shape = 's32[1]{0}', space=sflag, size = 0x4, scoped, tag = 'scoped memory for tpu_custom_call.1']
    #allocation10 [shape = 'u8[32768]{0}', space=vmem, size = 0x8000, scoped, tag = 'input window, operand 5, single buffered']
    #allocation11 [shape = 'u8[512]{0}', space=vmem, size = 0x400, scoped, tag = 'output window, operand 0, single buffered']
    %12 = vsyncpa [#allocation3], 0
    %13 = vsyncpa [#allocation6], 0
    %14 = vsyncpa [#allocation9], 0
    %15 = vsyncpa [#allocation4], 0
    // Predicated region
    $region2: #{tpu_custom_call.1} parent=1 // pred_check
      _
    $region3: #{tpu_custom_call.1} parent=1 // pred_check_branch
      %17 = sbr.rel (0) target = $region5
    $region4: #{tpu_custom_call.1} parent=1 // pred_region
      %s19 = ssub.s32 16, 16
      %20 = vsyncadd [#allocation3], %s19
      %s22 = sshll.u32 [#allocation2], 4
      %s23 = int_to_ptr.vmem [resolvable:$true] %s22
      %25 = dma.hbm_to_vmem [thread:$0]  %s0, 16, %s23, [#allocation3]
    $region5: #{tpu_custom_call.1} parent=1 // pred_fallthru
      _
    // Predicated region
    $region6: #{tpu_custom_call.1} parent=1 // pred_check
      _
    $region7: #{tpu_custom_call.1} parent=1 // pred_check_branch
      %27 = sbr.rel (0) target = $region9
    $region8: #{tpu_custom_call.1} parent=1 // pred_region
      _
    $region9: #{tpu_custom_call.1} parent=1 // pred_fallthru
      _
    // Predicated region
    $region10: #{tpu_custom_call.1} parent=1 // pred_check
      _
    $region11: #{tpu_custom_call.1} parent=1 // pred_check_branch
      %29 = sbr.rel (0) target = $region13
    $region12: #{tpu_custom_call.1} parent=1 // pred_region
      %s31 = ssub.s32 1536, 1536
      %32 = vsyncadd [#allocation6], %s31
      %s33 = sshll.u32 [#allocation5], 4
      %s34 = int_to_ptr.vmem [resolvable:$true] %s33
      %39 = dma.hbm_to_vmem [thread:$0]  %s2, 1536, %s34, [#allocation6], 128, 128, 8
    $region13: #{tpu_custom_call.1} parent=1 // pred_fallthru
      _
    // Predicated region
    $region14: #{tpu_custom_call.1} parent=1 // pred_check
      _
    $region15: #{tpu_custom_call.1} parent=1 // pred_check_branch
      %41 = sbr.rel (0) target = $region17
    $region16: #{tpu_custom_call.1} parent=1 // pred_region
      %s43 = ssub.s32 768, 768
      %44 = vsyncadd [#allocation6], %s43
      %s45 = sshll.u32 [#allocation7], 4
      %s46 = int_to_ptr.vmem [resolvable:$true] %s45
      %51 = dma.hbm_to_vmem [thread:$0]  %s3, 768, %s46, [#allocation6], 64, 64, 4
    $region17: #{tpu_custom_call.1} parent=1 // pred_fallthru
      _
    // Predicated region
    $region18: #{tpu_custom_call.1} parent=1 // pred_check
      _
    $region19: #{tpu_custom_call.1} parent=1 // pred_check_branch
      %53 = sbr.rel (0) target = $region21
    $region20: #{tpu_custom_call.1} parent=1 // pred_region
      %s55 = ssub.s32 256, 256
      %56 = vsyncadd [#allocation9], %s55
      %s57 = sshll.u32 [#allocation8], 4
      %s58 = int_to_ptr.vmem [resolvable:$true] %s57
      %63 = dma.hbm_to_vmem [thread:$0]  %s4, 256, %s58, [#allocation9], 64, 64, 4
    $region21: #{tpu_custom_call.1} parent=1 // pred_fallthru
      _
    // Predicated region
    $region22: #{tpu_custom_call.1} parent=1 // pred_check
      _
    $region23: #{tpu_custom_call.1} parent=1 // pred_check_branch
      %65 = sbr.rel (0) target = $region25
    $region24: #{tpu_custom_call.1} parent=1 // pred_region
      %s67 = ssub.s32 1024, 1024
      %68 = vsyncadd [#allocation9], %s67
      %s69 = sshll.u32 [#allocation10], 4
      %s70 = int_to_ptr.vmem [resolvable:$true] %s69
      %75 = dma.hbm_to_vmem [thread:$0]  %s5, 1024, %s70, [#allocation9], 64, 64, 4
    $region25: #{tpu_custom_call.1} parent=1 // pred_fallthru
      _
    // Predicated region
    $region26: #{tpu_custom_call.1} parent=1 // pred_check
      _
    $region27: #{tpu_custom_call.1} parent=1 // pred_check_branch
      %77 = sbr.rel (0) target = $region29
    $region28: #{tpu_custom_call.1} parent=1 // pred_region
      _
    $region29: #{tpu_custom_call.1} parent=1 // pred_fallthru
      _
    // Predicated region
    $region30: #{tpu_custom_call.1} parent=1 // pred_check
      _
    $region31: #{tpu_custom_call.1} parent=1 // pred_check_branch
      %79 = sbr.rel (0) target = $region33
    $region32: #{tpu_custom_call.1} parent=1 // pred_region
      %80 = dma.done [#allocation3], 16
    $region33: #{tpu_custom_call.1} parent=1 // pred_fallthru
      _
    // Predicated region
    $region34: #{tpu_custom_call.1} parent=1 // pred_check
      _
    $region35: #{tpu_custom_call.1} parent=1 // pred_check_branch
      %82 = sbr.rel (0) target = $region37
    $region36: #{tpu_custom_call.1} parent=1 // pred_region
      %83 = dma.done [#allocation6], 1536
    $region37: #{tpu_custom_call.1} parent=1 // pred_fallthru
      _
    // Predicated region
    $region38: #{tpu_custom_call.1} parent=1 // pred_check
      _
    $region39: #{tpu_custom_call.1} parent=1 // pred_check_branch
      %85 = sbr.rel (0) target = $region41
    $region40: #{tpu_custom_call.1} parent=1 // pred_region
      %86 = dma.done [#allocation6], 768
    $region41: #{tpu_custom_call.1} parent=1 // pred_fallthru
      _
    // Predicated region
    $region42: #{tpu_custom_call.1} parent=1 // pred_check
      _
    $region43: #{tpu_custom_call.1} parent=1 // pred_check_branch
      %88 = sbr.rel (0) target = $region45
    $region44: #{tpu_custom_call.1} parent=1 // pred_region
      %89 = dma.done [#allocation9], 256
    $region45: #{tpu_custom_call.1} parent=1 // pred_fallthru
      _
    // Predicated region
    $region46: #{tpu_custom_call.1} parent=1 // pred_check
      _
    $region47: #{tpu_custom_call.1} parent=1 // pred_check_branch
      %91 = sbr.rel (0) target = $region49
    $region48: #{tpu_custom_call.1} parent=1 // pred_region
      %92 = dma.done [#allocation9], 1024
    $region49: #{tpu_custom_call.1} parent=1 // pred_fallthru
      _
    %v94 = vld [vmem:[#allocation2] sm:$0x1]
    %v95 = vunpack.c.l.bf16 %v94
    %vm96 = vcmask 779264
    %v97 = vsel %vm96, %v95, -inf
    %98 = vmax.xlane.f32.xlu0 %v97
    %v99 = vpop.xlane.xlu0 %98
    %v100 = vsub.f32 %v95, %v99
    %v101 = vmul.f32 %v100, 1.442695
    %v102 = vpow.pop %v101
    %v103 = vld [vmem:[#allocation5] sm:$0xff]
    %v104 = vld [vmem:[#allocation5 + $0x8] sm:$0xff]
    %v105 = vld [vmem:[#allocation5 + $0x10] sm:$0xff]
    %v106 = vld [vmem:[#allocation5 + $0x18] sm:$0xff]
    %v107 = vld [vmem:[#allocation5 + $0x20] sm:$0xff]
    %v108 = vld [vmem:[#allocation5 + $0x28] sm:$0xff]
    %v109 = vld [vmem:[#allocation5 + $0x30] sm:$0xff]
    %v110 = vld [vmem:[#allocation5 + $0x38] sm:$0xff]
    %v111 = vld [vmem:[#allocation5 + $0x40] sm:$0xff]
    %v112 = vld [vmem:[#allocation5 + $0x48] sm:$0xff]
    %v113 = vld [vmem:[#allocation5 + $0x50] sm:$0xff]
    %v114 = vld [vmem:[#allocation5 + $0x58] sm:$0xff]
    %vm115 = vcmask 785408
    %v117 = vsel %vm115, %v102, 0
    %119 = vmatprep.subr.mxu0 0.0
    %120 = vmatpush1.msra.mxu0 %v103
    %121 = vmatprep.subr.mxu0 0.0
    %122 = vmatpush1.msra.mxu0 %v104
    %123 = vmatprep.subr.mxu0 0.0
    %124 = vmatpush1.msra.mxu0 %v105
    %125 = vmatprep.subr.mxu0 0.0
    %126 = vmatpush1.msra.mxu0 %v106
    %127 = vmatprep.subr.mxu0 0.0
    %128 = vmatpush1.msra.mxu0 %v107
    %129 = vmatprep.subr.mxu0 0.0
    %130 = vmatpush1.msra.mxu0 %v108
    %131 = vmatprep.subr.mxu0 0.0
    %132 = vmatpush1.msra.mxu0 %v109
    %133 = vmatprep.subr.mxu0 0.0
    %134 = vmatpush1.msra.mxu0 %v110
    %135 = vmatprep.subr.mxu0 0.0
    %136 = vmatpush1.msra.mxu0 %v111
    %137 = vmatprep.subr.mxu0 0.0
    %138 = vmatpush1.msra.mxu0 %v112
    %139 = vmatprep.subr.mxu0 0.0
    %140 = vmatpush1.msra.mxu0 %v113
    %141 = vmatprep.subr.mxu0 0.0
    %142 = vmatpush1.msra.mxu0 %v114
    %143 = vmatprep.subr.mxu0 0.0
    %144 = vmatpush1.msra.mxu0 0.0
    %145 = vmatprep.subr.mxu0 0.0
    %146 = vmatpush1.msra.mxu0 0.0
    %147 = vmatprep.subr.mxu0 0.0
    %148 = vmatpush1.msra.mxu0 0.0
    %149 = vmatprep.subr.mxu0 0.0
    %150 = vmatpush1.msra.mxu0 0.0
    %151 = vmatprep.subr.mxu0 0.0
    %152 = vmatpush1.msra.mxu0 0.0
    %153 = vmatprep.subr.mxu0 0.0
    %154 = vmatpush1.msra.mxu0 0.0
    %155 = vmatprep.subr.mxu0 0.0
    %156 = vmatpush1.msra.mxu0 0.0
    %157 = vmatprep.subr.mxu0 0.0
    %158 = vmatpush1.msra.mxu0 0.0
    %159 = vmatprep.subr.mxu0 0.0
    %160 = vmatpush1.msra.mxu0 0.0
    %161 = vmatprep.subr.mxu0 0.0
    %162 = vmatpush1.msra.mxu0 0.0
    %163 = vmatprep.subr.mxu0 0.0
    %164 = vmatpush1.msra.mxu0 0.0
    %165 = vmatprep.subr.mxu0 0.0
    %166 = vmatpush1.msra.mxu0 0.0
    %167 = vmatprep.subr.mxu0 0.0
    %168 = vmatpush1.msra.mxu0 0.0
    %169 = vmatprep.subr.mxu0 0.0
    %170 = vmatpush1.msra.mxu0 0.0
    %171 = vmatprep.subr.mxu0 0.0
    %172 = vmatpush1.msra.mxu0 0.0
    %173 = vmatprep.subr.mxu0 0.0
    %174 = vmatpush1.msra.mxu0 0.0
    %175 = vmatprep.subr.mxu0 0.0
    %176 = vmatpush1.msra.mxu0 0.0
    %177 = vmatprep.subr.mxu0 0.0
    %178 = vmatpush1.msra.mxu0 0.0
    %179 = vmatprep.subr.mxu0 0.0
    %180 = vmatpush1.msra.mxu0 0.0
    %181 = vmatprep.subr.mxu0 0.0
    %182 = vmatpush1.msra.mxu0 0.0
    %183 = vmatprep.mubr.f32.mxu0 0.0
    %184 = vmatmul.mubr.f32.gmra.mrb[0].mxu0 %v117
    %v185 = vpop.f32.mrb[0].mxu0
    %v186 = vadd.f32 0.0, %v185
    %v187 = vpop.f32.mrb[0].mxu0
    %188 = vdwg.mxu0
    %v189 = vrcp.pop %v186
    %v190 = vmul.f32 %v102, %v189
    %v191 = vpack.c.bf16 %v190, %v190
    %v192 = vld [vmem:[#allocation7] sm:$0xf]
    %v193 = vld [vmem:[#allocation7 + $0x4] sm:$0xf]
    %v194 = vld [vmem:[#allocation7 + $0x8] sm:$0xf]
    %v195 = vld [vmem:[#allocation7 + $0xc] sm:$0xf]
    %v196 = vld [vmem:[#allocation7 + $0x10] sm:$0xf]
    %v197 = vld [vmem:[#allocation7 + $0x14] sm:$0xf]
    %v198 = vld [vmem:[#allocation7 + $0x18] sm:$0xf]
    %v199 = vld [vmem:[#allocation7 + $0x1c] sm:$0xf]
    %v200 = vld [vmem:[#allocation7 + $0x20] sm:$0xf]
    %v201 = vld [vmem:[#allocation7 + $0x24] sm:$0xf]
    %v202 = vld [vmem:[#allocation7 + $0x28] sm:$0xf]
    %v203 = vld [vmem:[#allocation7 + $0x2c] sm:$0xf]
    %v204 = vld [vmem:[%s1] sm:$0x1]
    %v205 = vld [vmem:[#allocation8] sm:$0xf]
    %v206 = vld [vmem:[#allocation8 + $0x4] sm:$0xf]
    %v207 = vld [vmem:[#allocation8 + $0x8] sm:$0xf]
    %v208 = vld [vmem:[#allocation8 + $0xc] sm:$0xf]
    %v213 = vunpack.c.l.b16 %v205
    %v214 = vunpack.c.l.b16 %v206
    %v215 = vunpack.c.l.b16 %v207
    %v216 = vunpack.c.l.b16 %v208
    %v217 = vpack.c.b16 %v214, %v213
    %v218 = vpack.c.b16 %v216, %v215
    %vm221 = vcmask 261120
    %v223 = vsel %vm221, %v204, 0
    %225 = vmatprep.subr.bf16.mxu0 0
    %226 = vmatpush1.bf16.msra.mxu0 %v217
    %227 = vmatprep.subr.bf16.mxu0 0
    %228 = vmatpush1.bf16.msra.mxu0 %v218
    %229 = vmatprep.subr.bf16.mxu0 0
    %230 = vmatpush1.bf16.msra.mxu0 0
    %231 = vmatprep.subr.bf16.mxu0 0
    %232 = vmatpush1.bf16.msra.mxu0 0
    %233 = vmatprep.subr.bf16.mxu0 0
    %234 = vmatpush1.bf16.msra.mxu0 0
    %235 = vmatprep.subr.bf16.mxu0 0
    %236 = vmatpush1.bf16.msra.mxu0 0
    %237 = vmatprep.subr.bf16.mxu0 0
    %238 = vmatpush1.bf16.msra.mxu0 0
    %239 = vmatprep.subr.bf16.mxu0 0
    %240 = vmatpush1.bf16.msra.mxu0 0
    %241 = vmatprep.subr.bf16.mxu0 0
    %242 = vmatpush1.bf16.msra.mxu0 0
    %243 = vmatprep.subr.bf16.mxu0 0
    %244 = vmatpush1.bf16.msra.mxu0 0
    %245 = vmatprep.subr.bf16.mxu0 0
    %246 = vmatpush1.bf16.msra.mxu0 0
    %247 = vmatprep.subr.bf16.mxu0 0
    %248 = vmatpush1.bf16.msra.mxu0 0
    %249 = vmatprep.subr.bf16.mxu0 0
    %250 = vmatpush1.bf16.msra.mxu0 0
    %251 = vmatprep.subr.bf16.mxu0 0
    %252 = vmatpush1.bf16.msra.mxu0 0
    %253 = vmatprep.subr.bf16.mxu0 0
    %254 = vmatpush1.bf16.msra.mxu0 0
    %255 = vmatprep.subr.bf16.mxu0 0
    %256 = vmatpush1.bf16.msra.mxu0 0
    %257 = vmatprep.mubr.bf16.mxu0 0
    %258 = vmatmul.mubr.bf16.gmra.mrb[0].mxu0 %v223
    %v259 = vpop.f32.mrb[0].mxu0
    %v260 = vadd.f32 0.0, %v259
    %v261 = vpop.f32.mrb[0].mxu0
    %v262 = vpop.f32.mrb[0].mxu0
    %v263 = vpop.f32.mrb[0].mxu0
    %264 = vdwg.mxu0
    %v277 = vunpack.c.l.b16 %v192
    %v278 = vunpack.c.l.b16 %v193
    %v279 = vunpack.c.l.b16 %v194
    %v280 = vunpack.c.l.b16 %v195
    %v281 = vunpack.c.l.b16 %v196
    %v282 = vunpack.c.l.b16 %v197
    %v283 = vunpack.c.l.b16 %v198
    %v284 = vunpack.c.l.b16 %v199
    %v285 = vunpack.c.l.b16 %v200
    %v286 = vunpack.c.l.b16 %v201
    %v287 = vunpack.c.l.b16 %v202
    %v288 = vunpack.c.l.b16 %v203
    %v289 = vpack.c.b16 %v278, %v277
    %v290 = vpack.c.b16 %v280, %v279
    %v291 = vpack.c.b16 %v282, %v281
    %v292 = vpack.c.b16 %v284, %v283
    %v293 = vpack.c.b16 %v286, %v285
    %v294 = vpack.c.b16 %v288, %v287
    %v302 = vsel %vm115, %v191, 0
    %304 = vmatprep.subr.bf16.mxu0 0
    %305 = vmatpush1.bf16.msra.mxu0 %v289
    %306 = vmatprep.subr.bf16.mxu0 0
    %307 = vmatpush1.bf16.msra.mxu0 %v290
    %308 = vmatprep.subr.bf16.mxu0 0
    %309 = vmatpush1.bf16.msra.mxu0 %v291
    %310 = vmatprep.subr.bf16.mxu0 0
    %311 = vmatpush1.bf16.msra.mxu0 %v292
    %312 = vmatprep.subr.bf16.mxu0 0
    %313 = vmatpush1.bf16.msra.mxu0 %v293
    %314 = vmatprep.subr.bf16.mxu0 0
    %315 = vmatpush1.bf16.msra.mxu0 %v294
    %316 = vmatprep.subr.bf16.mxu0 0
    %317 = vmatpush1.bf16.msra.mxu0 0
    %318 = vmatprep.subr.bf16.mxu0 0
    %319 = vmatpush1.bf16.msra.mxu0 0
    %320 = vmatprep.subr.bf16.mxu0 0
    %321 = vmatpush1.bf16.msra.mxu0 0
    %322 = vmatprep.subr.bf16.mxu0 0
    %323 = vmatpush1.bf16.msra.mxu0 0
    %324 = vmatprep.subr.bf16.mxu0 0
    %325 = vmatpush1.bf16.msra.mxu0 0
    %326 = vmatprep.subr.bf16.mxu0 0
    %327 = vmatpush1.bf16.msra.mxu0 0
    %328 = vmatprep.subr.bf16.mxu0 0
    %329 = vmatpush1.bf16.msra.mxu0 0
    %330 = vmatprep.subr.bf16.mxu0 0
    %331 = vmatpush1.bf16.msra.mxu0 0
    %332 = vmatprep.subr.bf16.mxu0 0
    %333 = vmatpush1.bf16.msra.mxu0 0
    %334 = vmatprep.subr.bf16.mxu0 0
    %335 = vmatpush1.bf16.msra.mxu0 0
    %336 = vmatprep.mubr.bf16.mxu0 0
    %337 = vmatmul.mubr.bf16.gmra.mrb[0].mxu0 %v302
    %v338 = vpop.f32.mrb[0].mxu0
    %v339 = vadd.f32 %v260, %v338
    %v340 = vpop.f32.mrb[0].mxu0
    %v341 = vpop.f32.mrb[0].mxu0
    %v342 = vpop.f32.mrb[0].mxu0
    %343 = vdwg.mxu0
    %v344 = vld [vmem:[%s6] sm:$0x1]
    %v345 = vlaneseq
    %v346 = vshrl.u32 %v345, 7
    %v347 = vsub.s32 0, %v346
    %v348 = vrot.slane %v344, %v347
    %v349 = vadd.f32 %v339, %v348
    %v350 = vmax.f32 %v349, 0.0
    %v351 = vpack.c.bf16 %v350, %v350
    %v352 = vld [vmem:[#allocation10] sm:$0xf]
    %v353 = vld [vmem:[#allocation10 + $0x4] sm:$0xf]
    %v354 = vld [vmem:[#allocation10 + $0x8] sm:$0xf]
    %v355 = vld [vmem:[#allocation10 + $0xc] sm:$0xf]
    %v356 = vld [vmem:[#allocation10 + $0x10] sm:$0xf]
    %v357 = vld [vmem:[#allocation10 + $0x14] sm:$0xf]
    %v358 = vld [vmem:[#allocation10 + $0x18] sm:$0xf]
    %v359 = vld [vmem:[#allocation10 + $0x1c] sm:$0xf]
    %v360 = vld [vmem:[#allocation10 + $0x20] sm:$0xf]
    %v361 = vld [vmem:[#allocation10 + $0x24] sm:$0xf]
    %v362 = vld [vmem:[#allocation10 + $0x28] sm:$0xf]
    %v363 = vld [vmem:[#allocation10 + $0x2c] sm:$0xf]
    %v364 = vld [vmem:[#allocation10 + $0x30] sm:$0xf]
    %v365 = vld [vmem:[#allocation10 + $0x34] sm:$0xf]
    %v366 = vld [vmem:[#allocation10 + $0x38] sm:$0xf]
    %v367 = vld [vmem:[#allocation10 + $0x3c] sm:$0xf]
    %v368 = vld [vmem:[%s6 + $0x1] sm:$0x1]
    %v369 = vlaneseq
    %v370 = vshrl.u32 %v369, 7
    %v371 = vsub.s32 0, %v370
    %v372 = vrot.slane %v368, %v371
    %v389 = vunpack.c.l.b16 %v352
    %v390 = vunpack.c.l.b16 %v353
    %v391 = vunpack.c.l.b16 %v354
    %v392 = vunpack.c.l.b16 %v355
    %v393 = vunpack.c.l.b16 %v356
    %v394 = vunpack.c.l.b16 %v357
    %v395 = vunpack.c.l.b16 %v358
    %v396 = vunpack.c.l.b16 %v359
    %v397 = vunpack.c.l.b16 %v360
    %v398 = vunpack.c.l.b16 %v361
    %v399 = vunpack.c.l.b16 %v362
    %v400 = vunpack.c.l.b16 %v363
    %v401 = vunpack.c.l.b16 %v364
    %v402 = vunpack.c.l.b16 %v365
    %v403 = vunpack.c.l.b16 %v366
    %v404 = vunpack.c.l.b16 %v367
    %v405 = vpack.c.b16 %v390, %v389
    %v406 = vpack.c.b16 %v392, %v391
    %v407 = vpack.c.b16 %v394, %v393
    %v408 = vpack.c.b16 %v396, %v395
    %v409 = vpack.c.b16 %v398, %v397
    %v410 = vpack.c.b16 %v400, %v399
    %v411 = vpack.c.b16 %v402, %v401
    %v412 = vpack.c.b16 %v404, %v403
    %421 = vmatprep.subr.bf16.mxu0 0
    %422 = vmatpush1.bf16.msra.mxu0 %v405
    %423 = vmatprep.subr.bf16.mxu0 0
    %424 = vmatpush1.bf16.msra.mxu0 %v406
    %425 = vmatprep.subr.bf16.mxu0 0
    %426 = vmatpush1.bf16.msra.mxu0 %v407
    %427 = vmatprep.subr.bf16.mxu0 0
    %428 = vmatpush1.bf16.msra.mxu0 %v408
    %429 = vmatprep.subr.bf16.mxu0 0
    %430 = vmatpush1.bf16.msra.mxu0 %v409
    %431 = vmatprep.subr.bf16.mxu0 0
    %432 = vmatpush1.bf16.msra.mxu0 %v410
    %433 = vmatprep.subr.bf16.mxu0 0
    %434 = vmatpush1.bf16.msra.mxu0 %v411
    %435 = vmatprep.subr.bf16.mxu0 0
    %436 = vmatpush1.bf16.msra.mxu0 %v412
    %437 = vmatprep.subr.bf16.mxu0 0
    %438 = vmatpush1.bf16.msra.mxu0 0
    %439 = vmatprep.subr.bf16.mxu0 0
    %440 = vmatpush1.bf16.msra.mxu0 0
    %441 = vmatprep.subr.bf16.mxu0 0
    %442 = vmatpush1.bf16.msra.mxu0 0
    %443 = vmatprep.subr.bf16.mxu0 0
    %444 = vmatpush1.bf16.msra.mxu0 0
    %445 = vmatprep.subr.bf16.mxu0 0
    %446 = vmatpush1.bf16.msra.mxu0 0
    %447 = vmatprep.subr.bf16.mxu0 0
    %448 = vmatpush1.bf16.msra.mxu0 0
    %449 = vmatprep.subr.bf16.mxu0 0
    %450 = vmatpush1.bf16.msra.mxu0 0
    %451 = vmatprep.subr.bf16.mxu0 0
    %452 = vmatpush1.bf16.msra.mxu0 0
    %453 = vmatprep.mubr.bf16.mxu0 0
    %454 = vmatmul.mubr.bf16.gmra.mrb[0].mxu0 %v351
    %v455 = vpop.f32.mrb[0].mxu0
    %v456 = vadd.f32 %v372, %v455
    %v457 = vpop.f32.mrb[0].mxu0
    %v458 = vpop.f32.mrb[0].mxu0
    %v459 = vpop.f32.mrb[0].mxu0
    %460 = vdwg.mxu0
    %v461 = vpack.c.bf16 %v456, %v456
    %462 = vst [vmem:[#allocation11] sm:$0x1] %v461
    // Predicated region
    $region50: #{tpu_custom_call.1} parent=1 // pred_check
      _
    $region51: #{tpu_custom_call.1} parent=1 // pred_check_branch
      %464 = sbr.rel (0) target = $region53
    $region52: #{tpu_custom_call.1} parent=1 // pred_region
      %s466 = ssub.s32 16, 16
      %467 = vsyncadd [#allocation4], %s466
      %s469 = sshll.u32 [#allocation11], 4
      %s470 = int_to_ptr.vmem [resolvable:$true] %s469
      %472 = dma.vmem_to_hbm [thread:$0]  %s470, 16, %s7, [#allocation4]
    $region53: #{tpu_custom_call.1} parent=1 // pred_fallthru
      _
    // Predicated region
    $region54: #{tpu_custom_call.1} parent=1 // pred_check
      _
    $region55: #{tpu_custom_call.1} parent=1 // pred_check_branch
      %474 = sbr.rel (0) target = $region57
    $region56: #{tpu_custom_call.1} parent=1 // pred_region
      %475 = dma.done [#allocation4], 16
    $region57: #{tpu_custom_call.1} parent=1 // pred_fallthru
      _
    %476 = vsyncpa [#allocation3], 1
    %477 = vsyncpa [#allocation6], 1
    %478 = vsyncpa [#allocation9], 1
    %479 = vsyncpa [#allocation4], 1

</llo_original>
